<compile_context>
chip_gen: v7x
topology: tpu7x:2x2x1
jax: 0.10.0
libtpu: 0.0.40
codegen_flags: <defaults>
</compile_context>

<pallas_src>
import functools

import jax
import jax.numpy as jnp
from jax.experimental import pallas as pl
from jax.experimental.pallas import tpu as pltpu


def _round_up(x, m):
    return ((x + m - 1) // m) * m


def _vmem_limit_bytes():
    """Per-generation scoped-VMEM limit: ~48 MiB on v7x (64 MiB physical),
    up to 96 MiB on v5e/v6e (128 MiB physical); conservative fallback if the
    hardware query is unavailable."""
    cap = None
    try:
        cap = getattr(pltpu.get_tpu_info(), "vmem_capacity_bytes", None)
    except Exception:  # pragma: no cover - query not available
        cap = None
    if not cap:
        return 48 * 1024 * 1024  # safe on every generation
    return int(min(cap - 16 * 1024 * 1024, 96 * 1024 * 1024))


def _pick_tile_l(length, n, c_in, c_out, in_isize, out_isize, vmem_budget):
    """Largest lane-aligned (multiple-of-128) tile that fits the
    double-buffered VMEM budget of the heavier pass (x tile + out tile +
    resident weight + stats) and wastes at most ~1/8 of the row in padding."""
    l128 = _round_up(length, 128)
    c_in_p = _round_up(c_in, 8)
    c_out_p = _round_up(c_out, 8)
    # (n, c_out, 1) partial-stat arrays pad to (n, 8k, 128) lanes in VMEM.
    stats_bytes = 2 * 2 * n * c_out_p * 128 * 4 + 2 * 2 * c_out_p * 128 * 4

    def fits(t):
        work = (2 * c_in_p * t * in_isize          # x tiles (double-buffered)
                + 2 * c_out_p * t * out_isize      # output tiles
                + 2 * c_out_p * c_in_p * in_isize  # resident weight
                + stats_bytes)
        return int(work * 1.25) <= vmem_budget     # fudge for layout padding

    for t in sorted({l128, 4096, 2048, 1024, 512, 256, 128}, reverse=True):
        if t > l128 or not fits(t):
            continue
        waste = _round_up(l128, t) - l128
        if waste == 0 or 8 * waste <= l128:
            return t
    return 128


def conv_stats_kernel(x_ref, w_ref, ysum_ref, ysq_ref):
    # x_ref:    (Cin,  tile_L)  input tile (channels on sublanes, L on lanes)
    # w_ref:    (Cout, Cin)     resident conv weight
    # ysum_ref: (Cout, 1)       per-batch resident accumulator: sum_y
    # ysq_ref:  (Cout, 1)       per-batch resident accumulator: sum_y^2
    @pl.when(pl.program_id(1) == 0)
    def _init():
        ysum_ref[...] = jnp.zeros_like(ysum_ref)
        ysq_ref[...] = jnp.zeros_like(ysq_ref)

    # 1x1 Conv1d (bias=False) == channel matmul on the MXU, f32 accumulation.
    # Zero-padded L columns give y == 0 and contribute nothing to the stats.
    y = jnp.dot(w_ref[...], x_ref[...], preferred_element_type=jnp.float32)
    ysum_ref[...] += jnp.sum(y, axis=1, keepdims=True)
    ysq_ref[...] += jnp.sum(y * y, axis=1, keepdims=True)


def _conv_bn_relu_kernel(x_ref, w_ref, ysum_ref, ysq_ref, gamma_ref, beta_ref,
                         o_ref, *, inv_m, eps):
    # Recompute the 1x1 conv tile (MXU is otherwise idle, recompute beats an
    # f32 y round-trip through HBM in this bandwidth-bound regime).
    y = jnp.dot(w_ref[...], x_ref[...], preferred_element_type=jnp.float32)

    # Fold the BN constants in-kernel (tiny (Cout,1) math on idle VPU/EUP):
    # reduce the per-batch partial sums, then scale/shift.
    s = jnp.sum(ysum_ref[...], axis=0)                      # (Cout, 1)
    ss = jnp.sum(ysq_ref[...], axis=0)                      # (Cout, 1)
    mean = s * inv_m
    var = jnp.maximum(ss * inv_m - mean * mean, 0.0)        # clamp cancellation
    inv_std = jax.lax.rsqrt(var + eps)
    scale = gamma_ref[...] * inv_std                        # (Cout, 1)
    shift = beta_ref[...] - mean * scale                    # (Cout, 1)

    o_ref[...] = jnp.maximum(y * scale + shift, 0.0).astype(o_ref.dtype)


def transition_forward(x_ncl, conv_weight, gamma, beta, *, eps=1e-5,
                       matmul_dtype=jnp.bfloat16, out_dtype=jnp.float32):
    """x_ncl: (N, Cin, L); conv_weight: (Cout, Cin, 1); gamma/beta: (Cout,).
    Returns (N, Cout, L) in out_dtype.

    matmul_dtype=bf16 is safe on v5e/v6e/v7x: the MXU accumulates in f32 and
    all BN / elementwise math is f32; it halves x/W read traffic."""
    n, c_in, length = x_ncl.shape
    c_out = conv_weight.shape[0]
    m = n * length                       # TRUE element count for BN statistics

    in_isize = jnp.dtype(matmul_dtype).itemsize
    out_isize = jnp.dtype(out_dtype).itemsize
    vmem_limit = _vmem_limit_bytes()
    tile_l = _pick_tile_l(length, n, c_in, c_out, in_isize, out_isize,
                          int(vmem_limit * 0.8))
    l_pad = _round_up(length, tile_l)
    n_lt = l_pad // tile_l
    grid = (n, n_lt)
    m_pad = n * l_pad

    # Zero-pad L so every tile is full and lane-dense; padded columns produce
    # y == W @ 0 == 0, so sum / sum^2 are untouched and mean/var divide by the
    # true m -> exact batch statistics.
    w2d = conv_weight[:, :, 0].astype(matmul_dtype)          # (Cout, Cin)
    x_in = x_ncl.astype(matmul_dtype)
    if l_pad != length:
        x_in = jnp.pad(x_in, ((0, 0), (0, 0), (0, l_pad - length)))
    gamma2d = gamma.astype(jnp.float32).reshape(c_out, 1)
    beta2d = beta.astype(jnp.float32).reshape(c_out, 1)

    cparams_stats = pltpu.CompilerParams(
        dimension_semantics=("parallel", "arbitrary"),  # per-batch accumulators
        vmem_limit_bytes=vmem_limit)
    cparams_out = pltpu.CompilerParams(
        dimension_semantics=("parallel", "parallel"),   # megacore both axes
        vmem_limit_bytes=vmem_limit)

    # ---- Pass 1: 1x1 conv + streamed per-(batch, channel) stats, no y write --
    ysum, ysq = pl.pallas_call(
        conv_stats_kernel,
        grid=grid,
        in_specs=[
            pl.BlockSpec((None, c_in, tile_l), lambda i, l: (i, 0, l)),   # x
            pl.BlockSpec((c_out, c_in), lambda i, l: (0, 0)),             # W
        ],
        out_specs=[
            pl.BlockSpec((None, c_out, 1), lambda i, l: (i, 0, 0)),       # sum
            pl.BlockSpec((None, c_out, 1), lambda i, l: (i, 0, 0)),       # sumsq
        ],
        out_shape=[
            jax.ShapeDtypeStruct((n, c_out, 1), jnp.float32),
            jax.ShapeDtypeStruct((n, c_out, 1), jnp.float32),
        ],
        compiler_params=cparams_stats,
        cost_estimate=pl.CostEstimate(
            flops=2 * m_pad * c_in * c_out + 3 * m_pad * c_out,
            transcendentals=0,
            bytes_accessed=(m_pad * c_in * in_isize
                            + c_out * c_in * in_isize + 2 * n * c_out * 4)),
    )(x_in, w2d)

    # ---- Pass 2: recompute conv, fold BN constants in-kernel, ReLU, store ---
    kernel2 = functools.partial(_conv_bn_relu_kernel, inv_m=1.0 / m, eps=eps)
    out = pl.pallas_call(
        kernel2,
        grid=grid,
        in_specs=[
            pl.BlockSpec((None, c_in, tile_l), lambda i, l: (i, 0, l)),   # x
            pl.BlockSpec((c_out, c_in), lambda i, l: (0, 0)),             # W
            pl.BlockSpec((n, c_out, 1), lambda i, l: (0, 0, 0)),          # sum
            pl.BlockSpec((n, c_out, 1), lambda i, l: (0, 0, 0)),          # sumsq
            pl.BlockSpec((c_out, 1), lambda i, l: (0, 0)),                # gamma
            pl.BlockSpec((c_out, 1), lambda i, l: (0, 0)),                # beta
        ],
        out_specs=pl.BlockSpec((None, c_out, tile_l), lambda i, l: (i, 0, l)),
        out_shape=jax.ShapeDtypeStruct((n, c_out, l_pad), out_dtype),
        compiler_params=cparams_out,
        cost_estimate=pl.CostEstimate(
            flops=2 * m_pad * c_in * c_out + 5 * m_pad * c_out,
            transcendentals=0,
            bytes_accessed=(m_pad * c_in * in_isize
                            + m_pad * c_out * out_isize
                            + c_out * c_in * in_isize
                            + (2 * n + 2) * c_out * 4)),
    )(x_in, w2d, ysum, ysq, gamma2d, beta2d)

    if l_pad != length:
        out = out[:, :, :length]
    return out


def reference_forward(x_ncl, conv_weight, gamma, beta, eps=1e-5):
    """Pure-JAX reference (Conv1d k=1 no bias -> BatchNorm1d train -> ReLU)."""
    y = jnp.einsum('ncl,oc->nol', x_ncl, conv_weight[:, :, 0])
    mean = jnp.mean(y, axis=(0, 2), keepdims=True)
    var = jnp.mean((y - mean) ** 2, axis=(0, 2), keepdims=True)
    yn = (y - mean) / jnp.sqrt(var + eps)
    yn = yn * gamma[None, :, None] + beta[None, :, None]
    return jnp.maximum(yn, 0.0)


if __name__ == "__main__":
    key = jax.random.PRNGKey(0)
    k_x, k_w, k_x2 = jax.random.split(key, 3)

    # Small shapes consistent with the module: (N, C_in, L).
    N, C_IN, C_OUT = 2, 16, 8

    # Deterministic parameter init (Conv1d weight, kaiming-uniform-like bound;
    # BatchNorm1d default gamma=1, beta=0).
    bound = 1.0 / (C_IN ** 0.5)
    conv_w = jax.random.uniform(
        k_w, (C_OUT, C_IN, 1), jnp.float32, -bound, bound)
    gamma = jnp.ones((C_OUT,), jnp.float32)
    beta = jnp.zeros((C_OUT,), jnp.float32)

    # Case 1: L multiple of 128 (no padding), bf16 matmul operands (default).
    L1 = 384
    x1 = jax.random.normal(k_x, (N, C_IN, L1), jnp.float32)
    fwd_bf16 = jax.jit(lambda a, b, c, d: transition_forward(a, b, c, d))
    out1 = jax.block_until_ready(fwd_bf16(x1, conv_w, gamma, beta))
    ref1 = reference_forward(x1, conv_w, gamma, beta)
    assert out1.shape == (N, C_OUT, L1), out1.shape
    assert jnp.allclose(out1, ref1, atol=5e-2, rtol=5e-2), \
        float(jnp.max(jnp.abs(out1 - ref1)))

    # Case 2: ragged L (exercises zero-padding; stats stay exact) with f32
    # matmul operands for a bit-tight comparison against the f32 reference.
    L2 = 200
    x2 = jax.random.normal(k_x2, (N, C_IN, L2), jnp.float32)
    fwd_f32 = jax.jit(lambda a, b, c, d: transition_forward(
        a, b, c, d, matmul_dtype=jnp.float32))
    out2 = jax.block_until_ready(fwd_f32(x2, conv_w, gamma, beta))
    ref2 = reference_forward(x2, conv_w, gamma, beta)
    assert out2.shape == (N, C_OUT, L2), out2.shape
    assert jnp.allclose(out2, ref2, atol=1e-4, rtol=1e-4), \
        float(jnp.max(jnp.abs(out2 - ref2)))

    print("KERNEL_OK")
</pallas_src>

<mosaic_0001>
module attributes {stable_mosaic.version = 11 : i64} {
  func.func @conv_stats_kernel(%arg0: i32, %arg1: i32, %arg2: memref<1x16x384xbf16, #tpu.memory_space<vmem>>, %arg3: memref<8x16xbf16, #tpu.memory_space<vmem>>, %arg4: memref<1x8x1xf32, #tpu.memory_space<vmem>>, %arg5: memref<1x8x1xf32, #tpu.memory_space<vmem>>) attributes {dimension_semantics = [#tpu.dimension_semantics<parallel>, #tpu.dimension_semantics<arbitrary>], iteration_bounds = array<i64: 2, 1>, scalar_prefetch = 0 : i64, scratch_operands = 0 : i64, tpu.core_type = #tpu.core_type<tc>, window_params = [{transform_indices = @transform_0, window_bounds = array<i64: 1, 16, 384>}, {pipeline_mode = #tpu.pipeline_mode<synchronous>, transform_indices = @transform_1, window_bounds = array<i64: 8, 16>}, {transform_indices = @transform_2, window_bounds = array<i64: 1, 8, 1>}, {transform_indices = @transform_3, window_bounds = array<i64: 1, 8, 1>}]} {
    %c0_i32 = arith.constant 0 : i32
    %0 = arith.cmpi eq, %arg1, %c0_i32 : i32
    %1 = arith.extui %0 : i1 to i32
    %c0_i32_0 = arith.constant 0 : i32
    %2 = arith.cmpi ne, %1, %c0_i32_0 : i32
    scf.if %2 {
      %cst_19 = arith.constant 0.000000e+00 : f32
      %24 = vector.broadcast %cst_19 : f32 to vector<8x1xf32>
      %c0_20 = arith.constant 0 : index
      %c0_21 = arith.constant 0 : index
      %c0_22 = arith.constant 0 : index
      %25 = vector.load %arg4[%c0_20, %c0_21, %c0_22] : memref<1x8x1xf32, #tpu.memory_space<vmem>>, vector<1x8x1xf32>
      %26 = vector.shape_cast %25 : vector<1x8x1xf32> to vector<8x1xf32>
      %27 = vector.shape_cast %24 : vector<8x1xf32> to vector<1x8x1xf32>
      tpu.vector_store %arg4[%c0_20, %c0_21, %c0_22], %27 {strides = array<i32>} : memref<1x8x1xf32, #tpu.memory_space<vmem>>, vector<1x8x1xf32>,
      %cst_23 = arith.constant 0.000000e+00 : f32
      %28 = vector.broadcast %cst_23 : f32 to vector<8x1xf32>
      %c0_24 = arith.constant 0 : index
      %c0_25 = arith.constant 0 : index
      %c0_26 = arith.constant 0 : index
      %29 = vector.load %arg5[%c0_24, %c0_25, %c0_26] : memref<1x8x1xf32, #tpu.memory_space<vmem>>, vector<1x8x1xf32>
      %30 = vector.shape_cast %29 : vector<1x8x1xf32> to vector<8x1xf32>
      %31 = vector.shape_cast %28 : vector<8x1xf32> to vector<1x8x1xf32>
      tpu.vector_store %arg5[%c0_24, %c0_25, %c0_26], %31 {strides = array<i32>} : memref<1x8x1xf32, #tpu.memory_space<vmem>>, vector<1x8x1xf32>,
    } else {
    }
    %c0 = arith.constant 0 : index
    %c0_1 = arith.constant 0 : index
    %3 = vector.load %arg3[%c0, %c0_1] : memref<8x16xbf16, #tpu.memory_space<vmem>>, vector<8x16xbf16>
    %c0_2 = arith.constant 0 : index
    %c0_3 = arith.constant 0 : index
    %c0_4 = arith.constant 0 : index
    %4 = vector.load %arg2[%c0_2, %c0_3, %c0_4] : memref<1x16x384xbf16, #tpu.memory_space<vmem>>, vector<1x16x384xbf16>
    %5 = vector.shape_cast %4 : vector<1x16x384xbf16> to vector<16x384xbf16>
    %cst = arith.constant dense<0.000000e+00> : vector<8x384xf32>
    %6 = tpu.matmul %3, %5, %cst {dimension_numbers = #tpu.dot_dimension_numbers<[1], [0], [0], [1], [0, 0, 1, 1], [], []>} : vector<8x16xbf16>, vector<16x384xbf16>, vector<8x384xf32> -> vector<8x384xf32>
    %c0_5 = arith.constant 0 : index
    %c0_6 = arith.constant 0 : index
    %c0_7 = arith.constant 0 : index
    %7 = vector.load %arg4[%c0_5, %c0_6, %c0_7] : memref<1x8x1xf32, #tpu.memory_space<vmem>>, vector<1x8x1xf32>
    %8 = vector.shape_cast %7 : vector<1x8x1xf32> to vector<8x1xf32>
    %cst_8 = arith.constant dense<0.000000e+00> : vector<8xf32>
    %9 = vector.multi_reduction <add>, %6, %cst_8 [1] : vector<8x384xf32> to vector<8xf32>
    %10 = vector.shape_cast %9 : vector<8xf32> to vector<8x1xf32>
    %11 = arith.addf %8, %10 : vector<8x1xf32>
    %c0_9 = arith.constant 0 : index
    %c0_10 = arith.constant 0 : index
    %c0_11 = arith.constant 0 : index
    %12 = vector.load %arg4[%c0_9, %c0_10, %c0_11] : memref<1x8x1xf32, #tpu.memory_space<vmem>>, vector<1x8x1xf32>
    %13 = vector.shape_cast %12 : vector<1x8x1xf32> to vector<8x1xf32>
    %14 = vector.shape_cast %11 : vector<8x1xf32> to vector<1x8x1xf32>
    tpu.vector_store %arg4[%c0_9, %c0_10, %c0_11], %14 {strides = array<i32>} : memref<1x8x1xf32, #tpu.memory_space<vmem>>, vector<1x8x1xf32>,
    %c0_12 = arith.constant 0 : index
    %c0_13 = arith.constant 0 : index
    %c0_14 = arith.constant 0 : index
    %15 = vector.load %arg5[%c0_12, %c0_13, %c0_14] : memref<1x8x1xf32, #tpu.memory_space<vmem>>, vector<1x8x1xf32>
    %16 = vector.shape_cast %15 : vector<1x8x1xf32> to vector<8x1xf32>
    %17 = arith.mulf %6, %6 : vector<8x384xf32>
    %cst_15 = arith.constant dense<0.000000e+00> : vector<8xf32>
    %18 = vector.multi_reduction <add>, %17, %cst_15 [1] : vector<8x384xf32> to vector<8xf32>
    %19 = vector.shape_cast %18 : vector<8xf32> to vector<8x1xf32>
    %20 = arith.addf %16, %19 : vector<8x1xf32>
    %c0_16 = arith.constant 0 : index
    %c0_17 = arith.constant 0 : index
    %c0_18 = arith.constant 0 : index
    %21 = vector.load %arg5[%c0_16, %c0_17, %c0_18] : memref<1x8x1xf32, #tpu.memory_space<vmem>>, vector<1x8x1xf32>
    %22 = vector.shape_cast %21 : vector<1x8x1xf32> to vector<8x1xf32>
    %23 = vector.shape_cast %20 : vector<8x1xf32> to vector<1x8x1xf32>
    tpu.vector_store %arg5[%c0_16, %c0_17, %c0_18], %23 {strides = array<i32>} : memref<1x8x1xf32, #tpu.memory_space<vmem>>, vector<1x8x1xf32>,
    return
  }
  func.func @transform_0(%arg0: i32, %arg1: i32) -> (i32, i32, i32) {
    %c0_i32 = arith.constant 0 : i32
    %c0_i32_0 = arith.constant 0 : i32
    return %arg0, %c0_i32, %arg1 : i32, i32, i32
  }
  func.func @transform_1(%arg0: i32, %arg1: i32) -> (i32, i32) {
    %c0_i32 = arith.constant 0 : i32
    %c0_i32_0 = arith.constant 0 : i32
    %c0_i32_1 = arith.constant 0 : i32
    return %c0_i32, %c0_i32_0 : i32, i32
  }
  func.func @transform_2(%arg0: i32, %arg1: i32) -> (i32, i32, i32) {
    %c0_i32 = arith.constant 0 : i32
    %c0_i32_0 = arith.constant 0 : i32
    %c0_i32_1 = arith.constant 0 : i32
    return %arg0, %c0_i32, %c0_i32_0 : i32, i32, i32
  }
  func.func @transform_3(%arg0: i32, %arg1: i32) -> (i32, i32, i32) {
    %c0_i32 = arith.constant 0 : i32
    %c0_i32_0 = arith.constant 0 : i32
    %c0_i32_1 = arith.constant 0 : i32
    return %arg0, %c0_i32, %c0_i32_0 : i32, i32, i32
  }
}

module attributes {stable_mosaic.version = 11 : i64} {
  func.func @_conv_bn_relu_kernel(%arg0: i32, %arg1: i32, %arg2: memref<1x16x384xbf16, #tpu.memory_space<vmem>>, %arg3: memref<8x16xbf16, #tpu.memory_space<vmem>>, %arg4: memref<2x8x1xf32, #tpu.memory_space<vmem>>, %arg5: memref<2x8x1xf32, #tpu.memory_space<vmem>>, %arg6: memref<8x1xf32, #tpu.memory_space<vmem>>, %arg7: memref<8x1xf32, #tpu.memory_space<vmem>>, %arg8: memref<1x8x384xf32, #tpu.memory_space<vmem>>) attributes {dimension_semantics = [#tpu.dimension_semantics<parallel>, #tpu.dimension_semantics<parallel>], iteration_bounds = array<i64: 2, 1>, scalar_prefetch = 0 : i64, scratch_operands = 0 : i64, tpu.core_type = #tpu.core_type<tc>, window_params = [{transform_indices = @transform_0, window_bounds = array<i64: 1, 16, 384>}, {pipeline_mode = #tpu.pipeline_mode<synchronous>, transform_indices = @transform_1, window_bounds = array<i64: 8, 16>}, {pipeline_mode = #tpu.pipeline_mode<synchronous>, transform_indices = @transform_2, window_bounds = array<i64: 2, 8, 1>}, {pipeline_mode = #tpu.pipeline_mode<synchronous>, transform_indices = @transform_3, window_bounds = array<i64: 2, 8, 1>}, {pipeline_mode = #tpu.pipeline_mode<synchronous>, transform_indices = @transform_4, window_bounds = array<i64: 8, 1>}, {pipeline_mode = #tpu.pipeline_mode<synchronous>, transform_indices = @transform_5, window_bounds = array<i64: 8, 1>}, {transform_indices = @transform_6, window_bounds = array<i64: 1, 8, 384>}]} {
    %c0 = arith.constant 0 : index
    %c0_0 = arith.constant 0 : index
    %0 = vector.load %arg3[%c0, %c0_0] : memref<8x16xbf16, #tpu.memory_space<vmem>>, vector<8x16xbf16>
    %c0_1 = arith.constant 0 : index
    %c0_2 = arith.constant 0 : index
    %c0_3 = arith.constant 0 : index
    %1 = vector.load %arg2[%c0_1, %c0_2, %c0_3] : memref<1x16x384xbf16, #tpu.memory_space<vmem>>, vector<1x16x384xbf16>
    %2 = vector.shape_cast %1 : vector<1x16x384xbf16> to vector<16x384xbf16>
    %cst = arith.constant dense<0.000000e+00> : vector<8x384xf32>
    %3 = tpu.matmul %0, %2, %cst {dimension_numbers = #tpu.dot_dimension_numbers<[1], [0], [0], [1], [0, 0, 1, 1], [], []>} : vector<8x16xbf16>, vector<16x384xbf16>, vector<8x384xf32> -> vector<8x384xf32>
    %c0_4 = arith.constant 0 : index
    %c0_5 = arith.constant 0 : index
    %c0_6 = arith.constant 0 : index
    %4 = vector.load %arg4[%c0_4, %c0_5, %c0_6] : memref<2x8x1xf32, #tpu.memory_space<vmem>>, vector<2x8x1xf32>
    %cst_7 = arith.constant dense<0.000000e+00> : vector<8x1xf32>
    %5 = vector.multi_reduction <add>, %4, %cst_7 [0] : vector<2x8x1xf32> to vector<8x1xf32>
    %c0_8 = arith.constant 0 : index
    %c0_9 = arith.constant 0 : index
    %c0_10 = arith.constant 0 : index
    %6 = vector.load %arg5[%c0_8, %c0_9, %c0_10] : memref<2x8x1xf32, #tpu.memory_space<vmem>>, vector<2x8x1xf32>
    %cst_11 = arith.constant dense<0.000000e+00> : vector<8x1xf32>
    %7 = vector.multi_reduction <add>, %6, %cst_11 [0] : vector<2x8x1xf32> to vector<8x1xf32>
    %cst_12 = arith.constant 0.00130208337 : f32
    %8 = vector.broadcast %cst_12 : f32 to vector<8x1xf32>
    %9 = arith.mulf %5, %8 : vector<8x1xf32>
    %cst_13 = arith.constant 0.00130208337 : f32
    %10 = vector.broadcast %cst_13 : f32 to vector<8x1xf32>
    %11 = arith.mulf %7, %10 : vector<8x1xf32>
    %12 = arith.mulf %9, %9 : vector<8x1xf32>
    %13 = arith.subf %11, %12 : vector<8x1xf32>
    %cst_14 = arith.constant 0.000000e+00 : f32
    %14 = vector.broadcast %cst_14 : f32 to vector<8x1xf32>
    %15 = arith.maximumf %13, %14 : vector<8x1xf32>
    %cst_15 = arith.constant 9.99999974E-6 : f32
    %16 = vector.broadcast %cst_15 : f32 to vector<8x1xf32>
    %17 = arith.addf %15, %16 : vector<8x1xf32>
    %18 = math.rsqrt %17 : vector<8x1xf32>
    %c0_16 = arith.constant 0 : index
    %c0_17 = arith.constant 0 : index
    %19 = vector.load %arg6[%c0_16, %c0_17] : memref<8x1xf32, #tpu.memory_space<vmem>>, vector<8x1xf32>
    %20 = arith.mulf %19, %18 : vector<8x1xf32>
    %c0_18 = arith.constant 0 : index
    %c0_19 = arith.constant 0 : index
    %21 = vector.load %arg7[%c0_18, %c0_19] : memref<8x1xf32, #tpu.memory_space<vmem>>, vector<8x1xf32>
    %22 = arith.mulf %9, %20 : vector<8x1xf32>
    %23 = arith.subf %21, %22 : vector<8x1xf32>
    %24 = vector.broadcast %20 : vector<8x1xf32> to vector<8x384xf32>
    %25 = arith.mulf %3, %24 : vector<8x384xf32>
    %26 = vector.broadcast %23 : vector<8x1xf32> to vector<8x384xf32>
    %27 = arith.addf %25, %26 : vector<8x384xf32>
    %cst_20 = arith.constant 0.000000e+00 : f32
    %28 = vector.broadcast %cst_20 : f32 to vector<8x384xf32>
    %29 = arith.maximumf %27, %28 : vector<8x384xf32>
    %c0_21 = arith.constant 0 : index
    %c0_22 = arith.constant 0 : index
    %c0_23 = arith.constant 0 : index
    %30 = vector.load %arg8[%c0_21, %c0_22, %c0_23] : memref<1x8x384xf32, #tpu.memory_space<vmem>>, vector<1x8x384xf32>
    %31 = vector.shape_cast %30 : vector<1x8x384xf32> to vector<8x384xf32>
    %32 = vector.shape_cast %29 : vector<8x384xf32> to vector<1x8x384xf32>
    tpu.vector_store %arg8[%c0_21, %c0_22, %c0_23], %32 {strides = array<i32>} : memref<1x8x384xf32, #tpu.memory_space<vmem>>, vector<1x8x384xf32>,
    return
  }
  func.func @transform_0(%arg0: i32, %arg1: i32) -> (i32, i32, i32) {
    %c0_i32 = arith.constant 0 : i32
    %c0_i32_0 = arith.constant 0 : i32
    return %arg0, %c0_i32, %arg1 : i32, i32, i32
  }
  func.func @transform_1(%arg0: i32, %arg1: i32) -> (i32, i32) {
    %c0_i32 = arith.constant 0 : i32
    %c0_i32_0 = arith.constant 0 : i32
    %c0_i32_1 = arith.constant 0 : i32
    return %c0_i32, %c0_i32_0 : i32, i32
  }
  func.func @transform_2(%arg0: i32, %arg1: i32) -> (i32, i32, i32) {
    %c0_i32 = arith.constant 0 : i32
    %c0_i32_0 = arith.constant 0 : i32
    %c0_i32_1 = arith.constant 0 : i32
    %c0_i32_2 = arith.constant 0 : i32
    return %c0_i32, %c0_i32_0, %c0_i32_1 : i32, i32, i32
  }
  func.func @transform_3(%arg0: i32, %arg1: i32) -> (i32, i32, i32) {
    %c0_i32 = arith.constant 0 : i32
    %c0_i32_0 = arith.constant 0 : i32
    %c0_i32_1 = arith.constant 0 : i32
    %c0_i32_2 = arith.constant 0 : i32
    return %c0_i32, %c0_i32_0, %c0_i32_1 : i32, i32, i32
  }
  func.func @transform_4(%arg0: i32, %arg1: i32) -> (i32, i32) {
    %c0_i32 = arith.constant 0 : i32
    %c0_i32_0 = arith.constant 0 : i32
    %c0_i32_1 = arith.constant 0 : i32
    return %c0_i32, %c0_i32_0 : i32, i32
  }
  func.func @transform_5(%arg0: i32, %arg1: i32) -> (i32, i32) {
    %c0_i32 = arith.constant 0 : i32
    %c0_i32_0 = arith.constant 0 : i32
    %c0_i32_1 = arith.constant 0 : i32
    return %c0_i32, %c0_i32_0 : i32, i32
  }
  func.func @transform_6(%arg0: i32, %arg1: i32) -> (i32, i32, i32) {
    %c0_i32 = arith.constant 0 : i32
    %c0_i32_0 = arith.constant 0 : i32
    return %arg0, %c0_i32, %arg1 : i32, i32, i32
  }
}

</mosaic_0001>

<llo_original>
// kernel: _lambda_.2
$region0: #{_lambda_.2}
  #allocation0 [shape = 'u32[]', space=smem, size = 0x4, offset = 0x4, fixed_abs, tag = 'smem constant byte address 0x4 - core index']
  #allocation1 [shape = 'u32[144,128]{1,0:T(1,128)}', space=vmem, size = 0x12000, scoped, tag = 'internal scratch']
  %s0 = inlined_call_operand.vmem [shape: bf16[2,16,384], index: 0, kind: input, shape index: {}]
  %s1 = inlined_call_operand.vmem [shape: bf16[8,16], index: 1, kind: input, shape index: {}]
  %s2 = inlined_call_operand.vmem [shape: f32[2,8,1], index: 2, kind: output, shape index: {0}]
  %s3 = inlined_call_operand.vmem [shape: f32[2,8,1], index: 3, kind: output, shape index: {1}]
  %4 = xla_tuple %s2, %s3
  %s5 = sld [smem:[#allocation0]]
  $region53: #{_lambda_.2} parent=0
    _
  %s7 = ssub.s32 1, %s5
  %s8 = scalar_select 0, %s7, %s5
  loop: start=0, step=1, limit=4
  $region2: #{_lambda_.2} parent=0 // loop_pre_header
    _
  $region3: #{_lambda_.2} parent=0 // loop_header
    %s10 = sphi 0, %s14
    %p11 = scmp.ge.s32.totalorder %s10, 4
    %s17 = sphi 0, %s29
    %s18 = sphi 0, %s25
    %s19 = sphi 0, %s17
    %s20 = sphi 0, %s18
    %s21 = sphi 0, %s19
    %s22 = sphi 0, %s20
    %s34 = sphi 0, %s36
    %s37 = sphi 0, %s34
    %s38 = sphi 0, %s37
    %s54 = sphi 0, %s38
    %s58 = sphi 0, %s58
    %s60 = sphi 0, %s58
    %s61 = sphi 0, %s60
    %s75 = sphi 0, %s61
    %s81 = sphi 0, %s83
    %s84 = sphi 0, %s81
    %s85 = sphi 0, %s84
    %s101 = sphi 0, %s85
    %s107 = sphi 0, %s109
    %s110 = sphi 0, %s107
    %s111 = sphi 0, %s110
    %s127 = sphi 0, %s111
  $region4: #{_lambda_.2} parent=0 // loop_header_branch
    %13 = sbr.rel (%p11) target = $region8
  $region5: #{_lambda_.2} parent=0 // loop_body
    %s15 = ssub.s32 %s10, 1
    %s16 = ssub.s32 %s10, 2
    %s23 = sadd.s32 1, %s18
    %p24 = scmp.ge.s32.totalorder %s23, 1
    %s25 = scalar_select %p24, 0, %s23
    %s26 = sadd.s32 1, %s17
    %s27 = scalar_select %p24, %s26, %s17
    %p28 = scmp.ge.s32.totalorder %s27, 2
    %s29 = scalar_select %p28, 0, %s27
    %s30 = ssub.s32 %s17, %s29
    %s31 = ssub.s32 %s18, %s25
    %s32 = sor.u32 %s30, %s31
    %p33 = scmp.eq.s32.totalorder %s32, 0
    %s35 = sadd.s32 %s34, 1
    %s36 = scalar_select %p33, %s34, %s35
    %p39 = pneg %p33
    %p40 = scmp.eq.s32.totalorder %s10, 1
    %p41 = por %p39, %p40
    %p42 = scmp.ne.s32.totalorder %s34, %s37
    %p43 = scmp.eq.s32.totalorder %s10, 0
    %p44 = por %p42, %p43
    %p45 = scmp.ne.s32.totalorder %s34, %s37
    %p46 = scmp.eq.s32.totalorder %s15, 1
    %p47 = por %p45, %p46
    %p48 = scmp.ne.s32.totalorder %s37, %s38
    %p49 = scmp.eq.s32.totalorder %s15, 0
    %p50 = por %p48, %p49
    %p51 = scmp.ne.s32.totalorder %s37, %s38
    %p52 = scmp.eq.s32.totalorder %s16, 1
    %p53 = por %p51, %p52
    %p55 = scmp.ne.s32.totalorder %s38, %s54
    %p56 = scmp.eq.s32.totalorder %s16, 0
    %p57 = por %p55, %p56
    %s59 = sadd.s32 %s58, 1
    %p62 = scmp.eq.s32.totalorder %s10, 1
    %p63 = scmp.ne.s32.totalorder %s58, %s60
    %p64 = scmp.eq.s32.totalorder %s10, 0
    %p65 = por %p63, %p64
    %p66 = scmp.ne.s32.totalorder %s58, %s60
    %p67 = scmp.eq.s32.totalorder %s15, 1
    %p68 = por %p66, %p67
    %p69 = scmp.ne.s32.totalorder %s60, %s61
    %p70 = scmp.eq.s32.totalorder %s15, 0
    %p71 = por %p69, %p70
    %p72 = scmp.ne.s32.totalorder %s60, %s61
    %p73 = scmp.eq.s32.totalorder %s16, 1
    %p74 = por %p72, %p73
    %p76 = scmp.ne.s32.totalorder %s61, %s75
    %p77 = scmp.eq.s32.totalorder %s16, 0
    %p78 = por %p76, %p77
    %s79 = ssub.s32 %s17, %s29
    %p80 = scmp.eq.s32.totalorder %s79, 0
    %s82 = sadd.s32 %s81, 1
    %s83 = scalar_select %p80, %s81, %s82
    %p86 = pneg %p80
    %p87 = scmp.eq.s32.totalorder %s10, 1
    %p88 = por %p86, %p87
    %p89 = scmp.ne.s32.totalorder %s81, %s84
    %p90 = scmp.eq.s32.totalorder %s10, 0
    %p91 = por %p89, %p90
    %p92 = scmp.ne.s32.totalorder %s81, %s84
    %p93 = scmp.eq.s32.totalorder %s15, 1
    %p94 = por %p92, %p93
    %p95 = scmp.ne.s32.totalorder %s84, %s85
    %p96 = scmp.eq.s32.totalorder %s15, 0
    %p97 = por %p95, %p96
    %p98 = scmp.ne.s32.totalorder %s84, %s85
    %p99 = scmp.eq.s32.totalorder %s16, 1
    %p100 = por %p98, %p99
    %p102 = scmp.ne.s32.totalorder %s85, %s101
    %p103 = scmp.eq.s32.totalorder %s16, 0
    %p104 = por %p102, %p103
    %s105 = ssub.s32 %s17, %s29
    %p106 = scmp.eq.s32.totalorder %s105, 0
    %s108 = sadd.s32 %s107, 1
    %s109 = scalar_select %p106, %s107, %s108
    %p112 = pneg %p106
    %p113 = scmp.eq.s32.totalorder %s10, 1
    %p114 = por %p112, %p113
    %p115 = scmp.ne.s32.totalorder %s107, %s110
    %p116 = scmp.eq.s32.totalorder %s10, 0
    %p117 = por %p115, %p116
    %p118 = scmp.ne.s32.totalorder %s107, %s110
    %p119 = scmp.eq.s32.totalorder %s15, 1
    %p120 = por %p118, %p119
    %p121 = scmp.ne.s32.totalorder %s110, %s111
    %p122 = scmp.eq.s32.totalorder %s15, 0
    %p123 = por %p121, %p122
    %p124 = scmp.ne.s32.totalorder %s110, %s111
    %p125 = scmp.eq.s32.totalorder %s16, 1
    %p126 = por %p124, %p125
    %p128 = scmp.ne.s32.totalorder %s111, %s127
    %p129 = scmp.eq.s32.totalorder %s16, 0
    %p130 = por %p128, %p129
    %p131 = scmp.le.s32.totalorder 1, %s10
    %p132 = scmp.lt.s32.totalorder %s10, 3
    %p133 = pnand %p131, %p132
    %p134 = pneg %p133
    // Predicated region
    $region9: #{_lambda_.2} parent=5 // pred_check
      _
    $region10: #{_lambda_.2} parent=5 // pred_check_branch
      %136 = sbr.rel (%p133) target = $region12
    $region11: #{_lambda_.2} parent=5 // pred_region
      %s137 = ssub.s32 %s10, 1
      // Predicated region
      $region13: #{_lambda_.2} parent=11 // pred_check
        %p138 = pneg %p71
      $region14: #{_lambda_.2} parent=11 // pred_check_branch
        %140 = sbr.rel (%p138) target = $region16
      $region15: #{_lambda_.2} parent=11 // pred_region
        _
      $region16: #{_lambda_.2} parent=11 // pred_fallthru
        _
    $region12: #{_lambda_.2} parent=5 // pred_fallthru
      _
    %p141 = scmp.lt.s32.totalorder %s10, 2
    // Predicated region
    $region17: #{_lambda_.2} parent=5 // pred_check
      %p142 = pneg %p141
    $region18: #{_lambda_.2} parent=5 // pred_check_branch
      %144 = sbr.rel (%p142) target = $region20
    $region19: #{_lambda_.2} parent=5 // pred_region
      // Predicated region
      $region21: #{_lambda_.2} parent=19 // pred_check
        %p145 = pneg %p44
      $region22: #{_lambda_.2} parent=19 // pred_check_branch
        %147 = sbr.rel (%p145) target = $region24
      $region23: #{_lambda_.2} parent=19 // pred_region
        %s148 = smul.u32 3, %s18
        %p149 = scmp.lt.s32.totalorder %s17, 1
        %s150 = scalar_select %p149, %s17, 1
        %p151 = scmp.lt.s32.totalorder %s148, 2
        %s152 = scalar_select %p151, %s148, 2
        %s153 = smul.addr %s150, 6
        %s154 = sadd.s32 %s152, %s153
        %s155 = smul.addr %s154, 4
        %s156 = scalar_lea.vmem %s0, %s155
        %s157 = smul.u32 3, %s18
      $region24: #{_lambda_.2} parent=19 // pred_fallthru
        _
    $region20: #{_lambda_.2} parent=5 // pred_fallthru
      _
    %p158 = scmp.le.s32.totalorder 1, %s10
    %p159 = scmp.lt.s32.totalorder %s10, 3
    %p160 = pnand %p158, %p159
    %p161 = pneg %p160
    // Predicated region
    $region25: #{_lambda_.2} parent=5 // pred_check
      _
    $region26: #{_lambda_.2} parent=5 // pred_check_branch
      %163 = sbr.rel (%p160) target = $region28
    $region27: #{_lambda_.2} parent=5 // pred_region
      %s164 = ssub.s32 %s10, 1
      %s165 = smul.u32 3, %s20
      %p166 = scmp.lt.s32.totalorder %s19, 1
      %s167 = scalar_select %p166, %s19, 1
      %p168 = scmp.lt.s32.totalorder %s165, 2
      %s169 = scalar_select %p168, %s165, 2
      %s170 = smul.addr %s167, 6
      %s171 = sadd.s32 %s169, %s170
      %s172 = smul.addr %s171, 4
      %s173 = scalar_lea.vmem %s0, %s172
      %p174 = pneg %p50
      %p175 = pneg %p47
      %p176 = pneg %p71
      %p177 = pneg %p68
      %p178 = pneg %p97
      %p179 = pneg %p94
      %p180 = scmp.lt.s32.totalorder %s19, 1
      %s181 = scalar_select %p180, %s19, 1
      %s182 = smul.addr %s181, 8
      %s183 = scalar_lea.vmem %s2, %s182
      %p184 = pneg %p123
      %p185 = pneg %p120
      %p186 = scmp.lt.s32.totalorder %s19, 1
      %s187 = scalar_select %p186, %s19, 1
      %s188 = smul.addr %s187, 8
      %s189 = scalar_lea.vmem %s3, %s188
      %s190 = smul.u32 3, %s20
      %p191 = scmp.lt.s32.totalorder %s19, 1
      %s192 = scalar_select %p191, %s19, 1
      %p193 = scmp.lt.s32.totalorder %s190, 2
      %s194 = scalar_select %p193, %s190, 2
      %s195 = smul.addr %s192, 6
      %s196 = sadd.s32 %s194, %s195
      %s197 = smul.addr %s196, 4
      %s198 = scalar_lea.vmem %s0, %s197
      %s199 = smul.u32 3, %s20
      %p200 = scmp.lt.s32.totalorder %s19, 1
      %s201 = scalar_select %p200, %s19, 1
      %s202 = smul.addr %s201, 8
      %s203 = scalar_lea.vmem %s2, %s202
      %p204 = scmp.lt.s32.totalorder %s19, 1
      %s205 = scalar_select %p204, %s19, 1
      %s206 = smul.addr %s205, 8
      %s207 = scalar_lea.vmem %s3, %s206
      %p209 = scmp.eq.s32.totalorder %s20, 0
      // Predicated region
      $region29: #{_lambda_.2} parent=27 // pred_check
        %p210 = pneg %p209
      $region30: #{_lambda_.2} parent=27 // pred_check_branch
        %212 = sbr.rel (%p210) target = $region32
      $region31: #{_lambda_.2} parent=27 // pred_region
        %vm213 = vcmask 7168
        %214 = vst.msk [vmem:[%s203] sm:$0xff] %vm213, 0.0
        %215 = vst.msk [vmem:[%s207] sm:$0xff] %vm213, 0.0
      $region32: #{_lambda_.2} parent=27 // pred_fallthru
        _
      %v216 = vld [vmem:[%s1] sm:$0xf]
      %v217 = vld [vmem:[%s198] sm:$0xff]
      %v218 = vld [vmem:[%s198 + $0x8] sm:$0xf]
      %v219 = vld [vmem:[%s198 + $0xc] sm:$0xff]
      %v220 = vld [vmem:[%s198 + $0x14] sm:$0xf]
      %v225 = vunpack.c.l.b16 %v217
      %v226 = vunpack.c.h.b16 %v217
      %v227 = vunpack.c.l.b16 %v218
      %v228 = vunpack.c.l.b16 %v219
      %v229 = vunpack.c.h.b16 %v219
      %v230 = vunpack.c.l.b16 %v220
      %v231 = vpack.c.b16 %v228, %v225
      %v232 = vpack.c.b16 %v229, %v226
      %v233 = vpack.c.b16 %v230, %v227
      %vm237 = vcmask 130048
      %v239 = vsel %vm237, %v216, 0
      %241 = vmatprep.subr.bf16.mxu0 %v232
      %242 = vmatpush1.bf16.msra.mxu0 %v231
      %243 = vmatprep.subr.bf16.mxu0 0
      %244 = vmatpush1.bf16.msra.mxu0 0
      %245 = vmatprep.subr.bf16.mxu0 0
      %246 = vmatpush1.bf16.msra.mxu0 0
      %247 = vmatprep.subr.bf16.mxu0 0
      %248 = vmatpush1.bf16.msra.mxu0 0
      %249 = vmatprep.subr.bf16.mxu0 0
      %250 = vmatpush1.bf16.msra.mxu0 0
      %251 = vmatprep.subr.bf16.mxu0 0
      %252 = vmatpush1.bf16.msra.mxu0 0
      %253 = vmatprep.subr.bf16.mxu0 0
      %254 = vmatpush1.bf16.msra.mxu0 0
      %255 = vmatprep.subr.bf16.mxu0 0
      %256 = vmatpush1.bf16.msra.mxu0 0
      %257 = vmatprep.subr.bf16.mxu0 0
      %258 = vmatpush1.bf16.msra.mxu0 0
      %259 = vmatprep.subr.bf16.mxu0 0
      %260 = vmatpush1.bf16.msra.mxu0 0
      %261 = vmatprep.subr.bf16.mxu0 0
      %262 = vmatpush1.bf16.msra.mxu0 0
      %263 = vmatprep.subr.bf16.mxu0 0
      %264 = vmatpush1.bf16.msra.mxu0 0
      %265 = vmatprep.subr.bf16.mxu0 0
      %266 = vmatpush1.bf16.msra.mxu0 0
      %267 = vmatprep.subr.bf16.mxu0 0
      %268 = vmatpush1.bf16.msra.mxu0 0
      %269 = vmatprep.subr.bf16.mxu0 0
      %270 = vmatpush1.bf16.msra.mxu0 0
      %271 = vmatprep.subr.bf16.mxu0 0
      %272 = vmatpush1.bf16.msra.mxu0 0
      %273 = vmatprep.mubr.bf16.mxu0 0
      %274 = vmatmul.mubr.bf16.gmra.mrb[0].mxu0 %v239
      %v275 = vpop.f32.mrb[0].mxu0
      %v276 = vadd.f32 0.0, %v275
      %v277 = vpop.f32.mrb[0].mxu0
      %v278 = vadd.f32 0.0, %v277
      %v279 = vpop.f32.mrb[0].mxu0
      %v280 = vpop.f32.mrb[0].mxu0
      %281 = vdwg.mxu0
      %282 = vmatprep.subr.bf16.mxu0 0
      %283 = vmatpush1.bf16.msra.mxu0 %v233
      %284 = vmatprep.subr.bf16.mxu0 0
      %285 = vmatpush1.bf16.msra.mxu0 0
      %286 = vmatprep.subr.bf16.mxu0 0
      %287 = vmatpush1.bf16.msra.mxu0 0
      %288 = vmatprep.subr.bf16.mxu0 0
      %289 = vmatpush1.bf16.msra.mxu0 0
      %290 = vmatprep.subr.bf16.mxu0 0
      %291 = vmatpush1.bf16.msra.mxu0 0
      %292 = vmatprep.subr.bf16.mxu0 0
      %293 = vmatpush1.bf16.msra.mxu0 0
      %294 = vmatprep.subr.bf16.mxu0 0
      %295 = vmatpush1.bf16.msra.mxu0 0
      %296 = vmatprep.subr.bf16.mxu0 0
      %297 = vmatpush1.bf16.msra.mxu0 0
      %298 = vmatprep.subr.bf16.mxu0 0
      %299 = vmatpush1.bf16.msra.mxu0 0
      %300 = vmatprep.subr.bf16.mxu0 0
      %301 = vmatpush1.bf16.msra.mxu0 0
      %302 = vmatprep.subr.bf16.mxu0 0
      %303 = vmatpush1.bf16.msra.mxu0 0
      %304 = vmatprep.subr.bf16.mxu0 0
      %305 = vmatpush1.bf16.msra.mxu0 0
      %306 = vmatprep.subr.bf16.mxu0 0
      %307 = vmatpush1.bf16.msra.mxu0 0
      %308 = vmatprep.subr.bf16.mxu0 0
      %309 = vmatpush1.bf16.msra.mxu0 0
      %310 = vmatprep.subr.bf16.mxu0 0
      %311 = vmatpush1.bf16.msra.mxu0 0
      %312 = vmatprep.subr.bf16.mxu0 0
      %313 = vmatpush1.bf16.msra.mxu0 0
      %314 = vmatprep.mubr.bf16.mxu0 0
      %315 = vmatmul.mubr.bf16.gmra.mrb[0].mxu0 %v239
      %v316 = vpop.f32.mrb[0].mxu0
      %v317 = vadd.f32 0.0, %v316
      %v318 = vpop.f32.mrb[0].mxu0
      %v319 = vpop.f32.mrb[0].mxu0
      %v320 = vpop.f32.mrb[0].mxu0
      %321 = vdwg.mxu0
      %v322 = vld [vmem:[%s203] sm:$0xff]
      %v323 = vadd.f32 %v276, %v278
      %v324 = vadd.f32 %v323, %v317
      %325 = vadd.xlane.f32.xlu0 %v324
      %v326 = vpop.xlane.xlu0 %325
      %v327 = vadd.f32 %v322, %v326
      %vm328 = vcmask 7168
      %329 = vst.msk [vmem:[%s203] sm:$0xff] %vm328, %v327
      %v330 = vld [vmem:[%s207] sm:$0xff]
      %v331 = vmul.f32 %v276, %v276
      %v332 = vmul.f32 %v278, %v278
      %v333 = vmul.f32 %v317, %v317
      %v334 = vadd.f32 %v331, %v332
      %v335 = vadd.f32 %v334, %v333
      %336 = vadd.xlane.f32.xlu0 %v335
      %v337 = vpop.xlane.xlu0 %336
      %v338 = vadd.f32 %v330, %v337
      %339 = vst.msk [vmem:[%s207] sm:$0xff] %vm328, %v338
      %p340 = scmp.lt.s32.totalorder %s19, 1
      %s341 = scalar_select %p340, %s19, 1
      %s342 = smul.addr %s341, 8
      %s343 = scalar_lea.vmem %s2, %s342
      %p344 = scmp.lt.s32.totalorder %s19, 1
      %s345 = scalar_select %p344, %s19, 1
      %s346 = smul.addr %s345, 8
      %s347 = scalar_lea.vmem %s3, %s346
      // Predicated region
      $region33: #{_lambda_.2} parent=27 // pred_check
        %p348 = pneg %p94
      $region34: #{_lambda_.2} parent=27 // pred_check_branch
        %350 = sbr.rel (%p348) target = $region36
      $region35: #{_lambda_.2} parent=27 // pred_region
        _
      $region36: #{_lambda_.2} parent=27 // pred_fallthru
        _
      // Predicated region
      $region37: #{_lambda_.2} parent=27 // pred_check
        %p351 = pneg %p120
      $region38: #{_lambda_.2} parent=27 // pred_check_branch
        %353 = sbr.rel (%p351) target = $region40
      $region39: #{_lambda_.2} parent=27 // pred_region
        _
      $region40: #{_lambda_.2} parent=27 // pred_fallthru
        _
    $region28: #{_lambda_.2} parent=5 // pred_fallthru
      _
    %p354 = scmp.le.s32.totalorder 2, %s10
    // Predicated region
    $region41: #{_lambda_.2} parent=5 // pred_check
      %p355 = pneg %p354
    $region42: #{_lambda_.2} parent=5 // pred_check_branch
      %357 = sbr.rel (%p355) target = $region44
    $region43: #{_lambda_.2} parent=5 // pred_region
      %s358 = ssub.s32 %s10, 2
      // Predicated region
      $region45: #{_lambda_.2} parent=43 // pred_check
        %p359 = pneg %p100
      $region46: #{_lambda_.2} parent=43 // pred_check_branch
        %361 = sbr.rel (%p359) target = $region48
      $region47: #{_lambda_.2} parent=43 // pred_region
        %p362 = scmp.lt.s32.totalorder %s21, 1
        %s363 = scalar_select %p362, %s21, 1
        %s364 = smul.addr %s363, 8
        %s365 = scalar_lea.vmem %s2, %s364
      $region48: #{_lambda_.2} parent=43 // pred_fallthru
        _
      // Predicated region
      $region49: #{_lambda_.2} parent=43 // pred_check
        %p366 = pneg %p126
      $region50: #{_lambda_.2} parent=43 // pred_check_branch
        %368 = sbr.rel (%p366) target = $region52
      $region51: #{_lambda_.2} parent=43 // pred_region
        %p369 = scmp.lt.s32.totalorder %s21, 1
        %s370 = scalar_select %p369, %s21, 1
        %s371 = smul.addr %s370, 8
        %s372 = scalar_lea.vmem %s3, %s371
      $region52: #{_lambda_.2} parent=43 // pred_fallthru
        _
    $region44: #{_lambda_.2} parent=5 // pred_fallthru
      _
  $region6: #{_lambda_.2} parent=0 // loop_footer
    %s14 = sadd.s32 1, %s10
  $region7: #{_lambda_.2} parent=0 // loop_footer_branch
    %9 = sbr.rel target = $region3
  $region8: #{_lambda_.2} parent=0 // loop_exit
    _

// kernel: _lambda_.3
$region0: #{_lambda_.3}
  #allocation0 [shape = 'u32[]', space=smem, size = 0x4, offset = 0x4, fixed_abs, tag = 'smem constant byte address 0x4 - core index']
  #allocation1 [shape = 'u32[144,128]{1,0:T(1,128)}', space=vmem, size = 0x12000, scoped, tag = 'internal scratch']
  %s0 = inlined_call_operand.vmem [shape: bf16[2,16,384], index: 0, kind: input, shape index: {}]
  %s1 = inlined_call_operand.vmem [shape: bf16[8,16], index: 1, kind: input, shape index: {}]
  %s2 = inlined_call_operand.vmem [shape: f32[2,8,1], index: 2, kind: input, shape index: {}]
  %s3 = inlined_call_operand.vmem [shape: f32[2,8,1], index: 3, kind: input, shape index: {}]
  %s4 = inlined_call_operand.vmem [shape: f32[8,1], index: 4, kind: input, shape index: {}]
  %s5 = inlined_call_operand.vmem [shape: f32[8,1], index: 5, kind: input, shape index: {}]
  %s6 = inlined_call_operand.hbm [shape: f32[2,8,384], index: 6, kind: output, shape index: {}]
  %s7 = sld [smem:[#allocation0]]
  $region57: #{_lambda_.3} parent=0
    _
  %s9 = ssub.s32 1, %s7
  %s10 = scalar_select 0, %s9, %s7
  $region1: #{_lambda_.3} parent=0
    #allocation2 [shape = 'u8[24576]{0}', space=vmem, size = 0x6000, scoped, tag = 'output window, operand 0']
    #allocation3 [shape = 's32[2]{0}', space=sflag, size = 0x8, scoped, tag = 'scoped memory for _lambda_.3']
    %11 = vsyncpa [#allocation3], 0
    %s12 = scalar_lea.sflag [#allocation3], 1
    %13 = vsyncpa %s12, 0
    loop: start=0, step=1, limit=4
    $region2: #{_lambda_.3} parent=1 // loop_pre_header
      _
    $region3: #{_lambda_.3} parent=1 // loop_header
      %s15 = sphi 0, %s19
      %p16 = scmp.ge.s32.totalorder %s15, 4
      %s22 = sphi 0, %s34
      %s23 = sphi 0, %s30
      %s24 = sphi 0, %s22
      %s25 = sphi 0, %s23
      %s26 = sphi 0, %s24
      %s27 = sphi 0, %s25
      %s39 = sphi 0, %s41
      %s42 = sphi 0, %s39
      %s43 = sphi 0, %s42
      %s59 = sphi 0, %s43
      %s63 = sphi 0, %s63
      %s65 = sphi 0, %s63
      %s66 = sphi 0, %s65
      %s80 = sphi 0, %s66
      %s84 = sphi 0, %s84
      %s86 = sphi 0, %s84
      %s87 = sphi 0, %s86
      %s101 = sphi 0, %s87
      %s105 = sphi 0, %s105
      %s107 = sphi 0, %s105
      %s108 = sphi 0, %s107
      %s122 = sphi 0, %s108
      %s126 = sphi 0, %s126
      %s128 = sphi 0, %s126
      %s129 = sphi 0, %s128
      %s143 = sphi 0, %s129
      %s147 = sphi 0, %s147
      %s149 = sphi 0, %s147
      %s150 = sphi 0, %s149
      %s164 = sphi 0, %s150
      %s172 = sphi 0, %s174
      %s175 = sphi 0, %s172
      %s176 = sphi 0, %s175
      %s192 = sphi 0, %s176
    $region4: #{_lambda_.3} parent=1 // loop_header_branch
      %18 = sbr.rel (%p16) target = $region8
    $region5: #{_lambda_.3} parent=1 // loop_body
      %s20 = ssub.s32 %s15, 1
      %s21 = ssub.s32 %s15, 2
      %s28 = sadd.s32 1, %s23
      %p29 = scmp.ge.s32.totalorder %s28, 1
      %s30 = scalar_select %p29, 0, %s28
      %s31 = sadd.s32 1, %s22
      %s32 = scalar_select %p29, %s31, %s22
      %p33 = scmp.ge.s32.totalorder %s32, 2
      %s34 = scalar_select %p33, 0, %s32
      %s35 = ssub.s32 %s22, %s34
      %s36 = ssub.s32 %s23, %s30
      %s37 = sor.u32 %s35, %s36
      %p38 = scmp.eq.s32.totalorder %s37, 0
      %s40 = sadd.s32 %s39, 1
      %s41 = scalar_select %p38, %s39, %s40
      %p44 = pneg %p38
      %p45 = scmp.eq.s32.totalorder %s15, 1
      %p46 = por %p44, %p45
      %p47 = scmp.ne.s32.totalorder %s39, %s42
      %p48 = scmp.eq.s32.totalorder %s15, 0
      %p49 = por %p47, %p48
      %p50 = scmp.ne.s32.totalorder %s39, %s42
      %p51 = scmp.eq.s32.totalorder %s20, 1
      %p52 = por %p50, %p51
      %p53 = scmp.ne.s32.totalorder %s42, %s43
      %p54 = scmp.eq.s32.totalorder %s20, 0
      %p55 = por %p53, %p54
      %p56 = scmp.ne.s32.totalorder %s42, %s43
      %p57 = scmp.eq.s32.totalorder %s21, 1
      %p58 = por %p56, %p57
      %p60 = scmp.ne.s32.totalorder %s43, %s59
      %p61 = scmp.eq.s32.totalorder %s21, 0
      %p62 = por %p60, %p61
      %s64 = sadd.s32 %s63, 1
      %p67 = scmp.eq.s32.totalorder %s15, 1
      %p68 = scmp.ne.s32.totalorder %s63, %s65
      %p69 = scmp.eq.s32.totalorder %s15, 0
      %p70 = por %p68, %p69
      %p71 = scmp.ne.s32.totalorder %s63, %s65
      %p72 = scmp.eq.s32.totalorder %s20, 1
      %p73 = por %p71, %p72
      %p74 = scmp.ne.s32.totalorder %s65, %s66
      %p75 = scmp.eq.s32.totalorder %s20, 0
      %p76 = por %p74, %p75
      %p77 = scmp.ne.s32.totalorder %s65, %s66
      %p78 = scmp.eq.s32.totalorder %s21, 1
      %p79 = por %p77, %p78
      %p81 = scmp.ne.s32.totalorder %s66, %s80
      %p82 = scmp.eq.s32.totalorder %s21, 0
      %p83 = por %p81, %p82
      %s85 = sadd.s32 %s84, 1
      %p88 = scmp.eq.s32.totalorder %s15, 1
      %p89 = scmp.ne.s32.totalorder %s84, %s86
      %p90 = scmp.eq.s32.totalorder %s15, 0
      %p91 = por %p89, %p90
      %p92 = scmp.ne.s32.totalorder %s84, %s86
      %p93 = scmp.eq.s32.totalorder %s20, 1
      %p94 = por %p92, %p93
      %p95 = scmp.ne.s32.totalorder %s86, %s87
      %p96 = scmp.eq.s32.totalorder %s20, 0
      %p97 = por %p95, %p96
      %p98 = scmp.ne.s32.totalorder %s86, %s87
      %p99 = scmp.eq.s32.totalorder %s21, 1
      %p100 = por %p98, %p99
      %p102 = scmp.ne.s32.totalorder %s87, %s101
      %p103 = scmp.eq.s32.totalorder %s21, 0
      %p104 = por %p102, %p103
      %s106 = sadd.s32 %s105, 1
      %p109 = scmp.eq.s32.totalorder %s15, 1
      %p110 = scmp.ne.s32.totalorder %s105, %s107
      %p111 = scmp.eq.s32.totalorder %s15, 0
      %p112 = por %p110, %p111
      %p113 = scmp.ne.s32.totalorder %s105, %s107
      %p114 = scmp.eq.s32.totalorder %s20, 1
      %p115 = por %p113, %p114
      %p116 = scmp.ne.s32.totalorder %s107, %s108
      %p117 = scmp.eq.s32.totalorder %s20, 0
      %p118 = por %p116, %p117
      %p119 = scmp.ne.s32.totalorder %s107, %s108
      %p120 = scmp.eq.s32.totalorder %s21, 1
      %p121 = por %p119, %p120
      %p123 = scmp.ne.s32.totalorder %s108, %s122
      %p124 = scmp.eq.s32.totalorder %s21, 0
      %p125 = por %p123, %p124
      %s127 = sadd.s32 %s126, 1
      %p130 = scmp.eq.s32.totalorder %s15, 1
      %p131 = scmp.ne.s32.totalorder %s126, %s128
      %p132 = scmp.eq.s32.totalorder %s15, 0
      %p133 = por %p131, %p132
      %p134 = scmp.ne.s32.totalorder %s126, %s128
      %p135 = scmp.eq.s32.totalorder %s20, 1
      %p136 = por %p134, %p135
      %p137 = scmp.ne.s32.totalorder %s128, %s129
      %p138 = scmp.eq.s32.totalorder %s20, 0
      %p139 = por %p137, %p138
      %p140 = scmp.ne.s32.totalorder %s128, %s129
      %p141 = scmp.eq.s32.totalorder %s21, 1
      %p142 = por %p140, %p141
      %p144 = scmp.ne.s32.totalorder %s129, %s143
      %p145 = scmp.eq.s32.totalorder %s21, 0
      %p146 = por %p144, %p145
      %s148 = sadd.s32 %s147, 1
      %p151 = scmp.eq.s32.totalorder %s15, 1
      %p152 = scmp.ne.s32.totalorder %s147, %s149
      %p153 = scmp.eq.s32.totalorder %s15, 0
      %p154 = por %p152, %p153
      %p155 = scmp.ne.s32.totalorder %s147, %s149
      %p156 = scmp.eq.s32.totalorder %s20, 1
      %p157 = por %p155, %p156
      %p158 = scmp.ne.s32.totalorder %s149, %s150
      %p159 = scmp.eq.s32.totalorder %s20, 0
      %p160 = por %p158, %p159
      %p161 = scmp.ne.s32.totalorder %s149, %s150
      %p162 = scmp.eq.s32.totalorder %s21, 1
      %p163 = por %p161, %p162
      %p165 = scmp.ne.s32.totalorder %s150, %s164
      %p166 = scmp.eq.s32.totalorder %s21, 0
      %p167 = por %p165, %p166
      %s168 = ssub.s32 %s22, %s34
      %s169 = ssub.s32 %s23, %s30
      %s170 = sor.u32 %s168, %s169
      %p171 = scmp.eq.s32.totalorder %s170, 0
      %s173 = sadd.s32 %s172, 1
      %s174 = scalar_select %p171, %s172, %s173
      %p177 = pneg %p171
      %p178 = scmp.eq.s32.totalorder %s15, 1
      %p179 = por %p177, %p178
      %p180 = scmp.ne.s32.totalorder %s172, %s175
      %p181 = scmp.eq.s32.totalorder %s15, 0
      %p182 = por %p180, %p181
      %p183 = scmp.ne.s32.totalorder %s172, %s175
      %p184 = scmp.eq.s32.totalorder %s20, 1
      %p185 = por %p183, %p184
      %p186 = scmp.ne.s32.totalorder %s175, %s176
      %p187 = scmp.eq.s32.totalorder %s20, 0
      %p188 = por %p186, %p187
      %p189 = scmp.ne.s32.totalorder %s175, %s176
      %p190 = scmp.eq.s32.totalorder %s21, 1
      %p191 = por %p189, %p190
      %p193 = scmp.ne.s32.totalorder %s176, %s192
      %p194 = scmp.eq.s32.totalorder %s21, 0
      %p195 = por %p193, %p194
      %p196 = scmp.le.s32.totalorder 1, %s15
      %p197 = scmp.lt.s32.totalorder %s15, 3
      %p198 = pnand %p196, %p197
      %p199 = pneg %p198
      // Predicated region
      $region9: #{_lambda_.3} parent=5 // pred_check
        _
      $region10: #{_lambda_.3} parent=5 // pred_check_branch
        %201 = sbr.rel (%p198) target = $region12
      $region11: #{_lambda_.3} parent=5 // pred_region
        %s202 = ssub.s32 %s15, 1
        // Predicated region
        $region13: #{_lambda_.3} parent=11 // pred_check
          %p203 = pneg %p76
        $region14: #{_lambda_.3} parent=11 // pred_check_branch
          %205 = sbr.rel (%p203) target = $region16
        $region15: #{_lambda_.3} parent=11 // pred_region
          _
        $region16: #{_lambda_.3} parent=11 // pred_fallthru
          _
        // Predicated region
        $region17: #{_lambda_.3} parent=11 // pred_check
          %p206 = pneg %p97
        $region18: #{_lambda_.3} parent=11 // pred_check_branch
          %208 = sbr.rel (%p206) target = $region20
        $region19: #{_lambda_.3} parent=11 // pred_region
          _
        $region20: #{_lambda_.3} parent=11 // pred_fallthru
          _
        // Predicated region
        $region21: #{_lambda_.3} parent=11 // pred_check
          %p209 = pneg %p118
        $region22: #{_lambda_.3} parent=11 // pred_check_branch
          %211 = sbr.rel (%p209) target = $region24
        $region23: #{_lambda_.3} parent=11 // pred_region
          _
        $region24: #{_lambda_.3} parent=11 // pred_fallthru
          _
        // Predicated region
        $region25: #{_lambda_.3} parent=11 // pred_check
          %p212 = pneg %p139
        $region26: #{_lambda_.3} parent=11 // pred_check_branch
          %214 = sbr.rel (%p212) target = $region28
        $region27: #{_lambda_.3} parent=11 // pred_region
          _
        $region28: #{_lambda_.3} parent=11 // pred_fallthru
          _
        // Predicated region
        $region29: #{_lambda_.3} parent=11 // pred_check
          %p215 = pneg %p160
        $region30: #{_lambda_.3} parent=11 // pred_check_branch
          %217 = sbr.rel (%p215) target = $region32
        $region31: #{_lambda_.3} parent=11 // pred_region
          _
        $region32: #{_lambda_.3} parent=11 // pred_fallthru
          _
      $region12: #{_lambda_.3} parent=5 // pred_fallthru
        _
      %p218 = scmp.lt.s32.totalorder %s15, 2
      // Predicated region
      $region33: #{_lambda_.3} parent=5 // pred_check
        %p219 = pneg %p218
      $region34: #{_lambda_.3} parent=5 // pred_check_branch
        %221 = sbr.rel (%p219) target = $region36
      $region35: #{_lambda_.3} parent=5 // pred_region
        // Predicated region
        $region37: #{_lambda_.3} parent=35 // pred_check
          %p222 = pneg %p49
        $region38: #{_lambda_.3} parent=35 // pred_check_branch
          %224 = sbr.rel (%p222) target = $region40
        $region39: #{_lambda_.3} parent=35 // pred_region
          %s225 = smul.u32 3, %s23
          %p226 = scmp.lt.s32.totalorder %s22, 1
          %s227 = scalar_select %p226, %s22, 1
          %p228 = scmp.lt.s32.totalorder %s225, 2
          %s229 = scalar_select %p228, %s225, 2
          %s230 = smul.addr %s227, 6
          %s231 = sadd.s32 %s229, %s230
          %s232 = smul.addr %s231, 4
          %s233 = scalar_lea.vmem %s0, %s232
          %s234 = smul.u32 3, %s23
        $region40: #{_lambda_.3} parent=35 // pred_fallthru
          _
      $region36: #{_lambda_.3} parent=5 // pred_fallthru
        _
      %p235 = scmp.le.s32.totalorder 1, %s15
      %p236 = scmp.lt.s32.totalorder %s15, 3
      %p237 = pnand %p235, %p236
      %p238 = pneg %p237
      // Predicated region
      $region41: #{_lambda_.3} parent=5 // pred_check
        _
      $region42: #{_lambda_.3} parent=5 // pred_check_branch
        %240 = sbr.rel (%p237) target = $region44
      $region43: #{_lambda_.3} parent=5 // pred_region
        %s241 = ssub.s32 %s15, 1
        %s242 = smul.u32 3, %s25
        %p243 = scmp.lt.s32.totalorder %s24, 1
        %s244 = scalar_select %p243, %s24, 1
        %p245 = scmp.lt.s32.totalorder %s242, 2
        %s246 = scalar_select %p245, %s242, 2
        %s247 = smul.addr %s244, 6
        %s248 = sadd.s32 %s246, %s247
        %s249 = smul.addr %s248, 4
        %s250 = scalar_lea.vmem %s0, %s249
        %p251 = pneg %p55
        %p252 = pneg %p52
        %p253 = pneg %p76
        %p254 = pneg %p73
        %p255 = pneg %p97
        %p256 = pneg %p94
        %p257 = pneg %p118
        %p258 = pneg %p115
        %p259 = pneg %p139
        %p260 = pneg %p136
        %p261 = pneg %p160
        %p262 = pneg %p157
        %p263 = pneg %p188
        %p264 = pneg %p185
        %s265 = sand.u32 %s175, 1
        %s266 = scalar_lea.sflag [#allocation3], %s265
        %s267 = sand.u32 %s175, 1
        %s268 = smul.addr %s267, 24
        %s269 = scalar_lea.vmem [#allocation2], %s268
        %s270 = smul.u32 3, %s25
        %p271 = scmp.lt.s32.totalorder %s24, 1
        %s272 = scalar_select %p271, %s24, 1
        %p273 = scmp.lt.s32.totalorder %s270, 2
        %s274 = scalar_select %p273, %s270, 2
        %s275 = smul.addr %s272, 6
        %s276 = sadd.s32 %s274, %s275
        %s277 = smul.addr %s276, 4
        %s278 = scalar_lea.vmem %s0, %s277
        %s279 = smul.u32 3, %s25
        %s280 = smul.u32 3, %s25
        %v282 = vld [vmem:[%s1] sm:$0xf]
        %v283 = vld [vmem:[%s278] sm:$0xff]
        %v284 = vld [vmem:[%s278 + $0x8] sm:$0xf]
        %v285 = vld [vmem:[%s278 + $0xc] sm:$0xff]
        %v286 = vld [vmem:[%s278 + $0x14] sm:$0xf]
        %v291 = vunpack.c.l.b16 %v283
        %v292 = vunpack.c.h.b16 %v283
        %v293 = vunpack.c.l.b16 %v284
        %v294 = vunpack.c.l.b16 %v285
        %v295 = vunpack.c.h.b16 %v285
        %v296 = vunpack.c.l.b16 %v286
        %v297 = vpack.c.b16 %v294, %v291
        %v298 = vpack.c.b16 %v295, %v292
        %v299 = vpack.c.b16 %v296, %v293
        %vm303 = vcmask 130048
        %v305 = vsel %vm303, %v282, 0
        %307 = vmatprep.subr.bf16.mxu0 %v298
        %308 = vmatpush1.bf16.msra.mxu0 %v297
        %309 = vmatprep.subr.bf16.mxu0 0
        %310 = vmatpush1.bf16.msra.mxu0 0
        %311 = vmatprep.subr.bf16.mxu0 0
        %312 = vmatpush1.bf16.msra.mxu0 0
        %313 = vmatprep.subr.bf16.mxu0 0
        %314 = vmatpush1.bf16.msra.mxu0 0
        %315 = vmatprep.subr.bf16.mxu0 0
        %316 = vmatpush1.bf16.msra.mxu0 0
        %317 = vmatprep.subr.bf16.mxu0 0
        %318 = vmatpush1.bf16.msra.mxu0 0
        %319 = vmatprep.subr.bf16.mxu0 0
        %320 = vmatpush1.bf16.msra.mxu0 0
        %321 = vmatprep.subr.bf16.mxu0 0
        %322 = vmatpush1.bf16.msra.mxu0 0
        %323 = vmatprep.subr.bf16.mxu0 0
        %324 = vmatpush1.bf16.msra.mxu0 0
        %325 = vmatprep.subr.bf16.mxu0 0
        %326 = vmatpush1.bf16.msra.mxu0 0
        %327 = vmatprep.subr.bf16.mxu0 0
        %328 = vmatpush1.bf16.msra.mxu0 0
        %329 = vmatprep.subr.bf16.mxu0 0
        %330 = vmatpush1.bf16.msra.mxu0 0
        %331 = vmatprep.subr.bf16.mxu0 0
        %332 = vmatpush1.bf16.msra.mxu0 0
        %333 = vmatprep.subr.bf16.mxu0 0
        %334 = vmatpush1.bf16.msra.mxu0 0
        %335 = vmatprep.subr.bf16.mxu0 0
        %336 = vmatpush1.bf16.msra.mxu0 0
        %337 = vmatprep.subr.bf16.mxu0 0
        %338 = vmatpush1.bf16.msra.mxu0 0
        %339 = vmatprep.mubr.bf16.mxu0 0
        %340 = vmatmul.mubr.bf16.gmra.mrb[0].mxu0 %v305
        %v341 = vpop.f32.mrb[0].mxu0
        %v342 = vadd.f32 0.0, %v341
        %v343 = vpop.f32.mrb[0].mxu0
        %v344 = vadd.f32 0.0, %v343
        %v345 = vpop.f32.mrb[0].mxu0
        %v346 = vpop.f32.mrb[0].mxu0
        %347 = vdwg.mxu0
        %348 = vmatprep.subr.bf16.mxu0 0
        %349 = vmatpush1.bf16.msra.mxu0 %v299
        %350 = vmatprep.subr.bf16.mxu0 0
        %351 = vmatpush1.bf16.msra.mxu0 0
        %352 = vmatprep.subr.bf16.mxu0 0
        %353 = vmatpush1.bf16.msra.mxu0 0
        %354 = vmatprep.subr.bf16.mxu0 0
        %355 = vmatpush1.bf16.msra.mxu0 0
        %356 = vmatprep.subr.bf16.mxu0 0
        %357 = vmatpush1.bf16.msra.mxu0 0
        %358 = vmatprep.subr.bf16.mxu0 0
        %359 = vmatpush1.bf16.msra.mxu0 0
        %360 = vmatprep.subr.bf16.mxu0 0
        %361 = vmatpush1.bf16.msra.mxu0 0
        %362 = vmatprep.subr.bf16.mxu0 0
        %363 = vmatpush1.bf16.msra.mxu0 0
        %364 = vmatprep.subr.bf16.mxu0 0
        %365 = vmatpush1.bf16.msra.mxu0 0
        %366 = vmatprep.subr.bf16.mxu0 0
        %367 = vmatpush1.bf16.msra.mxu0 0
        %368 = vmatprep.subr.bf16.mxu0 0
        %369 = vmatpush1.bf16.msra.mxu0 0
        %370 = vmatprep.subr.bf16.mxu0 0
        %371 = vmatpush1.bf16.msra.mxu0 0
        %372 = vmatprep.subr.bf16.mxu0 0
        %373 = vmatpush1.bf16.msra.mxu0 0
        %374 = vmatprep.subr.bf16.mxu0 0
        %375 = vmatpush1.bf16.msra.mxu0 0
        %376 = vmatprep.subr.bf16.mxu0 0
        %377 = vmatpush1.bf16.msra.mxu0 0
        %378 = vmatprep.subr.bf16.mxu0 0
        %379 = vmatpush1.bf16.msra.mxu0 0
        %380 = vmatprep.mubr.bf16.mxu0 0
        %381 = vmatmul.mubr.bf16.gmra.mrb[0].mxu0 %v305
        %v382 = vpop.f32.mrb[0].mxu0
        %v383 = vadd.f32 0.0, %v382
        %v384 = vpop.f32.mrb[0].mxu0
        %v385 = vpop.f32.mrb[0].mxu0
        %v386 = vpop.f32.mrb[0].mxu0
        %387 = vdwg.mxu0
        %v388 = vld [vmem:[%s2] sm:$0xff]
        %v389 = vld [vmem:[%s2 + $0x8] sm:$0xff]
        %vm390 = vcmask 7168
        %v391 = vsel %vm390, %v388, 0.0
        %v392 = vsel %vm390, %v389, 0.0
        %v393 = vadd.f32 %v391, %v392
        %v394 = vld [vmem:[%s3] sm:$0xff]
        %v395 = vld [vmem:[%s3 + $0x8] sm:$0xff]
        %v396 = vsel %vm390, %v394, 0.0
        %v397 = vsel %vm390, %v395, 0.0
        %v398 = vadd.f32 %v396, %v397
        %v399 = vmul.f32 %v393, 0.0013020834
        %v400 = vmul.f32 %v398, 0.0013020834
        %v401 = vmul.f32 %v399, %v399
        %v402 = vsub.f32 %v400, %v401
        %v403 = vmax.f32 %v402, 0.0
        %v404 = vadd.f32 %v403, 1e-05
        %v405 = vrsqrt.pop %v404
        %v406 = vld [vmem:[%s4] sm:$0xff]
        %v407 = vmul.f32 %v406, %v405
        %v408 = vld [vmem:[%s5] sm:$0xff]
        %v409 = vmul.f32 %v399, %v407
        %v410 = vsub.f32 %v408, %v409
        %412 = vset.pattern.permute.xlu0 0
        %413 = vperm.xlu0 %412, %v407
        %v414 = vpop.permute.xlu0 %413
        %v416 = vmul.f32 %v342, %v414
        %v417 = vmul.f32 %v344, %v414
        %v418 = vmul.f32 %v383, %v414
        %420 = vset.pattern.permute.xlu0 0
        %421 = vperm.xlu0 %420, %v410
        %v422 = vpop.permute.xlu0 %421
        %v424 = vadd.f32 %v416, %v422
        %v425 = vadd.f32 %v417, %v422
        %v426 = vadd.f32 %v418, %v422
        %v427 = vmax.f32 %v424, 0.0
        %v428 = vmax.f32 %v425, 0.0
        %v429 = vmax.f32 %v426, 0.0
        %430 = vst [vmem:[%s269] sm:$0xff] %v427
        %431 = vst [vmem:[%s269 + $0x8] sm:$0xff] %v428
        %432 = vst [vmem:[%s269 + $0x10] sm:$0xff] %v429
        %s433 = sand.u32 %s175, 1
        %s434 = scalar_lea.sflag [#allocation3], %s433
        %s435 = sand.u32 %s175, 1
        %s436 = smul.addr %s435, 24
        %s437 = scalar_lea.vmem [#allocation2], %s436
        // Predicated region
        $region45: #{_lambda_.3} parent=43 // pred_check
          %p438 = pneg %p185
        $region46: #{_lambda_.3} parent=43 // pred_check_branch
          %440 = sbr.rel (%p438) target = $region48
        $region47: #{_lambda_.3} parent=43 // pred_region
          %s441 = smul.u32 3, %s25
          %s443 = ssub.s32 384, 384
          %444 = vsyncadd %s434, %s443
          %s445 = smul.addr %s24, 3
          %s446 = sadd.s32 %s441, %s445
          %s447 = smul.addr %s446, 128
          %s448 = scalar_lea.hbm %s6, %s447
          %s450 = sshll.u32 %s437, 4
          %s451 = int_to_ptr.vmem [resolvable:$true] %s450
          %453 = dma.vmem_to_hbm [thread:$0]  %s451, 384, %s448, %s434
        $region48: #{_lambda_.3} parent=43 // pred_fallthru
          _
      $region44: #{_lambda_.3} parent=5 // pred_fallthru
        _
      %p454 = scmp.le.s32.totalorder 2, %s15
      // Predicated region
      $region49: #{_lambda_.3} parent=5 // pred_check
        %p455 = pneg %p454
      $region50: #{_lambda_.3} parent=5 // pred_check_branch
        %457 = sbr.rel (%p455) target = $region52
      $region51: #{_lambda_.3} parent=5 // pred_region
        %s458 = ssub.s32 %s15, 2
        // Predicated region
        $region53: #{_lambda_.3} parent=51 // pred_check
          %p459 = pneg %p191
        $region54: #{_lambda_.3} parent=51 // pred_check_branch
          %461 = sbr.rel (%p459) target = $region56
        $region55: #{_lambda_.3} parent=51 // pred_region
          %s462 = sand.u32 %s176, 1
          %s463 = scalar_lea.sflag [#allocation3], %s462
          %s464 = sand.u32 %s176, 1
          %s465 = smul.addr %s464, 24
          %s466 = scalar_lea.vmem [#allocation2], %s465
          %467 = dma.done %s463, 384
        $region56: #{_lambda_.3} parent=51 // pred_fallthru
          _
      $region52: #{_lambda_.3} parent=5 // pred_fallthru
        _
    $region6: #{_lambda_.3} parent=1 // loop_footer
      %s19 = sadd.s32 1, %s15
    $region7: #{_lambda_.3} parent=1 // loop_footer_branch
      %14 = sbr.rel target = $region3
    $region8: #{_lambda_.3} parent=1 // loop_exit
      _
    %468 = vsyncpa [#allocation3], 1
    %s469 = scalar_lea.sflag [#allocation3], 1
    %470 = vsyncpa %s469, 1

</llo_original>
